<compile_context>
chip_gen: v7x
topology: tpu7x:2x2x1
jax: 0.10.0
libtpu: 0.0.40
codegen_flags: <defaults>
</compile_context>

<pallas_src>
import math

import jax
import jax.numpy as jnp
from jax import lax
from jax.experimental import pallas as pl
from jax.experimental.pallas import tpu as pltpu

_SUB = 8          # sublane group size (f32 vreg height)
_LANE = 128       # lane padding
_MAX_CHUNK = 128  # timesteps per grid step (multiple of 8)


def _round_up(n, m):
    return ((n + m - 1) // m) * m


def _activation(x, positive):
    t = jnp.tanh(x)
    return jnp.maximum(t, 0.0) if positive else t


def _pfc_step_kernel(alpha, positive):
    """One forward() step.  Weights are alpha*Jrec^T; ext is alpha*(input+input_x)."""
    one_minus_a = 1.0 - alpha

    def kernel(w_ref, act_ref, xinp_ref, ext_ref, rout_ref, xinp_out_ref):
        xadd = jnp.dot(act_ref[...].astype(w_ref.dtype), w_ref[...],
                       preferred_element_type=jnp.float32) + ext_ref[...]
        xinp_new = one_minus_a * xinp_ref[...] + xadd
        xinp_out_ref[...] = xinp_new
        rout_ref[...] = _activation(xinp_new, positive)

    return kernel


def _pfc_run_kernel(alpha, positive, chunk, total_steps):
    """`chunk` forward() steps per grid iteration.  State is carried in vregs
    (fori_loop carry) inside the chunk and persisted in VMEM scratch across
    grid steps; rout is written one tile-aligned (8, Np) group at a time."""
    one_minus_a = 1.0 - alpha
    n_groups = chunk // _SUB
    needs_mask = (total_steps % chunk) != 0   # only the last chunk can be partial

    def kernel(w_ref, act0_ref, xinp0_ref, ext_ref,
               rout_ref, xinp_out_ref, act_out_ref,
               act_sc, xinp_sc):
        c = pl.program_id(0)

        @pl.when(c == 0)
        def _():
            act_sc[...] = act0_ref[...]
            xinp_sc[...] = xinp0_ref[...]

        base = c * chunk

        def group_body(g, carry):
            act, xinp = carry
            ext_blk = ext_ref[g]                      # (8, Np), alpha-prescaled
            rows = []
            for t in range(_SUB):                     # static 8-step unroll
                xadd = jnp.dot(act.astype(w_ref.dtype), w_ref[...],
                               preferred_element_type=jnp.float32)
                xadd = xadd + ext_blk[t:t + 1, :]
                xinp_new = one_minus_a * xinp + xadd
                r = _activation(xinp_new, positive)
                rows.append(r)                        # padded rows get sliced off later
                if needs_mask:
                    valid = (base + g * _SUB + t) < total_steps
                    xinp_new = jnp.where(valid, xinp_new, xinp)
                    r = jnp.where(valid, r, act)
                act, xinp = r, xinp_new
            rout_ref[g] = jnp.concatenate(rows, axis=0)   # aligned (8, Np) store
            return act, xinp

        act, xinp = lax.fori_loop(0, n_groups, group_body,
                                  (act_sc[...], xinp_sc[...]))
        act_sc[...] = act
        xinp_sc[...] = xinp
        act_out_ref[...] = act
        xinp_out_ref[...] = xinp

    return kernel


class PallasPFC:
    """JAX/Pallas port of PytorchPFC.  Module state (xinp, activity) lives on
    device in a padded (1, Np) layout and is carried between kernel calls."""

    def __init__(self, n_neuron, n_neuron_per_cue, key,
                 positiveRates=True, MDeffect=True, noisePresent=False,
                 weight_dtype=None):
        if noisePresent:
            # TODO(synk): noisePresent=True (torch.normal noise injection) not
            # implemented; would need pltpu.prng_seed + pltpu.stateful_normal.
            raise NotImplementedError("noisePresent=True not supported")
        self.N = n_neuron
        self.Nsub = n_neuron_per_cue
        self.tau = 0.02
        self.dt = 0.001
        self.alpha = self.dt / self.tau
        self.positiveRates = positiveRates
        self.G = 0.75 if MDeffect else 1.875
        self.Np = _round_up(max(n_neuron, _LANE), _LANE)
        if weight_dtype is None:
            # bf16 halves weight streaming where the per-step vld of Np^2 f32
            # weights is the bottleneck; small nets stay f32 for tight accuracy.
            weight_dtype = jnp.bfloat16 if self.Np >= 512 else jnp.float32
        self._w_dtype = weight_dtype

        k_w, k_x = jax.random.split(key)
        # init_weights: Jrec ~ N(0, G/sqrt(2*Nsub)), row-mean subtracted.
        std = self.G / math.sqrt(self.Nsub * 2)
        jrec = std * jax.random.normal(k_w, (self.N, self.N), dtype=jnp.float32)
        self.Jrec = jrec - jnp.mean(jrec, axis=1, keepdims=True)

        # alpha-folded, transposed, zero-padded weights — built once, device-resident.
        w_p = (jnp.zeros((self.Np, self.Np), jnp.float32)
               .at[:self.N, :self.N].set(self.alpha * self.Jrec.T))
        self._w_p = w_p.astype(self._w_dtype)

        # init_activity: xinp ~ U[0, 0.1), activity = activation(xinp).
        xinp0 = jax.random.uniform(k_x, (self.N,), dtype=jnp.float32) * 0.1
        self._xinp_p = self._pad_vec(xinp0)
        self._act_p = self._pad_vec(_activation(xinp0, self.positiveRates))

        self._build_step_fn()
        self._run_fns = {}

    # -- padded-state plumbing -------------------------------------------------
    def _pad_vec(self, v):
        return (jnp.zeros((1, self.Np), jnp.float32)
                .at[0, :self.N].set(jnp.asarray(v, jnp.float32)))

    @property
    def xinp(self):
        return self._xinp_p[0, :self.N]

    @xinp.setter
    def xinp(self, v):
        self._xinp_p = self._pad_vec(v)

    @property
    def activity(self):
        return self._act_p[0, :self.N]

    @activity.setter
    def activity(self, v):
        self._act_p = self._pad_vec(v)

    # -- kernel builders --------------------------------------------------------
    def _build_step_fn(self):
        Np, N, alpha = self.Np, self.N, self.alpha
        vmem = pl.BlockSpec(memory_space=pltpu.MemorySpace.VMEM)
        w_bytes = Np * Np * jnp.dtype(self._w_dtype).itemsize
        step_call = pl.pallas_call(
            _pfc_step_kernel(alpha, self.positiveRates),
            out_shape=(jax.ShapeDtypeStruct((1, Np), jnp.float32),
                       jax.ShapeDtypeStruct((1, Np), jnp.float32)),
            in_specs=[vmem] * 4,
            out_specs=(vmem, vmem),
            compiler_params=pltpu.CompilerParams(
                vmem_limit_bytes=int(min(max(2 * w_bytes + (2 << 20), 32 << 20),
                                         64 << 20))),
        )

        def _step(w_p, act_p, xinp_p, ext):
            ext_p = (jnp.zeros((1, Np), jnp.float32)
                     .at[0, :N].set(alpha * ext.astype(jnp.float32)))
            rout_p, xinp_new_p = step_call(w_p, act_p, xinp_p, ext_p)
            return rout_p, xinp_new_p, rout_p[0, :N]

        self._step_fn = jax.jit(_step)

    def _get_run_fn(self, n_steps):
        if n_steps in self._run_fns:
            return self._run_fns[n_steps]
        Np, N, alpha = self.Np, self.N, self.alpha
        chunk = min(_round_up(n_steps, _SUB), _MAX_CHUNK)
        t_pad = _round_up(n_steps, chunk)
        grid = (t_pad // chunk,)
        w_bytes = Np * Np * jnp.dtype(self._w_dtype).itemsize
        stream_bytes = 2 * 2 * chunk * Np * 4            # ext + rout, double-buffered
        vmem_limit = int(min(max(2 * w_bytes + stream_bytes + (4 << 20), 32 << 20),
                             64 << 20))

        run_call = pl.pallas_call(
            _pfc_run_kernel(alpha, self.positiveRates, chunk, n_steps),
            out_shape=(
                jax.ShapeDtypeStruct((t_pad // _SUB, _SUB, Np), jnp.float32),
                jax.ShapeDtypeStruct((1, Np), jnp.float32),
                jax.ShapeDtypeStruct((1, Np), jnp.float32)),
            grid_spec=pltpu.PrefetchScalarGridSpec(
                num_scalar_prefetch=0,
                grid=grid,
                in_specs=[
                    pl.BlockSpec((Np, Np), lambda c: (0, 0)),            # weights (resident)
                    pl.BlockSpec((1, Np), lambda c: (0, 0)),             # act0
                    pl.BlockSpec((1, Np), lambda c: (0, 0)),             # xinp0
                    pl.BlockSpec((chunk // _SUB, _SUB, Np),
                                 lambda c: (c, 0, 0)),                   # ext (streamed)
                ],
                out_specs=(
                    pl.BlockSpec((chunk // _SUB, _SUB, Np),
                                 lambda c: (c, 0, 0)),                   # rout (streamed)
                    pl.BlockSpec((1, Np), lambda c: (0, 0)),             # xinp_out (resident)
                    pl.BlockSpec((1, Np), lambda c: (0, 0)),             # act_out (resident)
                ),
                scratch_shapes=[pltpu.VMEM((1, Np), jnp.float32),
                                pltpu.VMEM((1, Np), jnp.float32)]),
            compiler_params=pltpu.CompilerParams(
                dimension_semantics=("arbitrary",),      # time is a true recurrence
                vmem_limit_bytes=vmem_limit),
            cost_estimate=pl.CostEstimate(
                flops=2 * n_steps * Np * Np + 8 * n_steps * Np,
                transcendentals=n_steps * Np,
                bytes_accessed=w_bytes + 2 * t_pad * Np * 4 + 6 * Np * 4),
        )

        def _run(w_p, act_p, xinp_p, ext_seq):
            ext_p = (jnp.zeros((t_pad, Np), jnp.float32)
                     .at[:n_steps, :N].set(alpha * ext_seq.astype(jnp.float32)))
            ext_p = ext_p.reshape(t_pad // _SUB, _SUB, Np)
            routs_p, xinp_new_p, act_new_p = run_call(w_p, act_p, xinp_p, ext_p)
            routs = routs_p.reshape(t_pad, Np)[:n_steps, :N]
            return routs, xinp_new_p, act_new_p

        fn = jax.jit(_run)
        self._run_fns[n_steps] = fn
        return fn

    # -- PyTorch-equivalent API -------------------------------------------------
    def forward(self, inp, input_x=None):
        # TODO(synk): this step path still re-DMAs the (Np, Np) weights HBM->VMEM
        # every call; prefer run_sequence(), which amortizes them across T steps.
        ext = inp if input_x is None else inp + input_x
        rout_p, xinp_p, rout = self._step_fn(self._w_p, self._act_p,
                                             self._xinp_p, ext)
        self._xinp_p = xinp_p
        self._act_p = rout_p
        return rout

    def run_sequence(self, ext_seq):
        """Equivalent to calling forward(ext_seq[t]) for every t, but all steps
        run inside one time-chunk-pipelined Pallas kernel invocation."""
        n_steps = int(ext_seq.shape[0])
        routs, xinp_p, act_p = self._get_run_fn(n_steps)(
            self._w_p, self._act_p, self._xinp_p, ext_seq)
        self._xinp_p = xinp_p
        self._act_p = act_p
        return routs


def pfc_reference(jrec, xinp0, act0, ext_seq, alpha, positive):
    """Pure-JAX reference: T sequential forward() steps (original formula)."""
    def step(carry, ext):
        xinp, act = carry
        xadd = jnp.dot(jrec, act, precision=lax.Precision.HIGHEST) + ext
        xinp = xinp + alpha * (-xinp + xadd)
        r = _activation(xinp, positive)
        return (xinp, r), r

    (xinp_f, act_f), routs = lax.scan(step, (xinp0, act0), ext_seq)
    return routs, xinp_f, act_f


if __name__ == "__main__":
    N, NSUB, T = 64, 16, 8
    key = jax.random.PRNGKey(0)
    k_model, k_inp = jax.random.split(key)

    model = PallasPFC(N, NSUB, key=k_model)
    xinp0, act0 = model.xinp, model.activity
    inputs = 0.1 * jax.random.normal(k_inp, (T, N), dtype=jnp.float32)

    routs_ref, xinp_ref, act_ref = pfc_reference(
        model.Jrec, xinp0, act0, inputs, model.alpha, model.positiveRates)

    # Path 1: step-by-step forward() calls (matches the PyTorch module API).
    routs_step = jnp.stack([model.forward(inputs[t]) for t in range(T)])
    routs_step = jax.block_until_ready(routs_step)
    assert jnp.allclose(routs_step, routs_ref, atol=1e-4, rtol=1e-4)
    assert jnp.allclose(model.xinp, xinp_ref, atol=1e-4, rtol=1e-4)
    assert jnp.allclose(model.activity, act_ref, atol=1e-4, rtol=1e-4)

    # Path 2: all T steps fused into one time-chunk-pipelined kernel.
    model.xinp, model.activity = xinp0, act0
    routs_run = jax.block_until_ready(model.run_sequence(inputs))
    assert jnp.allclose(routs_run, routs_ref, atol=1e-4, rtol=1e-4)
    assert jnp.allclose(model.xinp, xinp_ref, atol=1e-4, rtol=1e-4)
    assert jnp.allclose(model.activity, act_ref, atol=1e-4, rtol=1e-4)

    # Path 3: a T that does not divide the time chunk (exercises masking path).
    model.xinp, model.activity = xinp0, act0
    T2 = 13
    inputs2 = 0.1 * jax.random.normal(jax.random.PRNGKey(1), (T2, N),
                                      dtype=jnp.float32)
    routs_ref2, xinp_ref2, act_ref2 = pfc_reference(
        model.Jrec, xinp0, act0, inputs2, model.alpha, model.positiveRates)
    routs_run2 = jax.block_until_ready(model.run_sequence(inputs2))
    assert jnp.allclose(routs_run2, routs_ref2, atol=1e-4, rtol=1e-4)
    assert jnp.allclose(model.xinp, xinp_ref2, atol=1e-4, rtol=1e-4)
    assert jnp.allclose(model.activity, act_ref2, atol=1e-4, rtol=1e-4)

    print("KERNEL_OK")
</pallas_src>

<mosaic_0001>
module attributes {stable_mosaic.version = 11 : i64} {
  func.func @kernel(%arg0: memref<128x128xf32, #tpu.memory_space<vmem>>, %arg1: memref<1x128xf32, #tpu.memory_space<vmem>>, %arg2: memref<1x128xf32, #tpu.memory_space<vmem>>, %arg3: memref<1x128xf32, #tpu.memory_space<vmem>>, %arg4: memref<1x128xf32, #tpu.memory_space<vmem>>, %arg5: memref<1x128xf32, #tpu.memory_space<vmem>>) attributes {dimension_semantics = [], scalar_prefetch = 0 : i64, scratch_operands = 0 : i64, tpu.core_type = #tpu.core_type<tc>} {
    %c0 = arith.constant 0 : index
    %c0_0 = arith.constant 0 : index
    %0 = vector.load %arg1[%c0, %c0_0] : memref<1x128xf32, #tpu.memory_space<vmem>>, vector<1x128xf32>
    %c0_1 = arith.constant 0 : index
    %c0_2 = arith.constant 0 : index
    %1 = vector.load %arg0[%c0_1, %c0_2] : memref<128x128xf32, #tpu.memory_space<vmem>>, vector<128x128xf32>
    %cst = arith.constant dense<0.000000e+00> : vector<1x128xf32>
    %2 = tpu.matmul %0, %1, %cst {dimension_numbers = #tpu.dot_dimension_numbers<[1], [0], [0], [1], [0, 0, 1, 1], [], []>} : vector<1x128xf32>, vector<128x128xf32>, vector<1x128xf32> -> vector<1x128xf32>
    %c0_3 = arith.constant 0 : index
    %c0_4 = arith.constant 0 : index
    %3 = vector.load %arg3[%c0_3, %c0_4] : memref<1x128xf32, #tpu.memory_space<vmem>>, vector<1x128xf32>
    %4 = arith.addf %2, %3 : vector<1x128xf32>
    %c0_5 = arith.constant 0 : index
    %c0_6 = arith.constant 0 : index
    %5 = vector.load %arg2[%c0_5, %c0_6] : memref<1x128xf32, #tpu.memory_space<vmem>>, vector<1x128xf32>
    %cst_7 = arith.constant 0.949999988 : f32
    %6 = vector.broadcast %cst_7 : f32 to vector<1x128xf32>
    %7 = arith.mulf %6, %5 : vector<1x128xf32>
    %8 = arith.addf %7, %4 : vector<1x128xf32>
    %c0_8 = arith.constant 0 : index
    %c0_9 = arith.constant 0 : index
    %9 = vector.load %arg5[%c0_8, %c0_9] : memref<1x128xf32, #tpu.memory_space<vmem>>, vector<1x128xf32>
    tpu.vector_store %arg5[%c0_8, %c0_9], %8 {strides = array<i32>} : memref<1x128xf32, #tpu.memory_space<vmem>>, vector<1x128xf32>,
    %10 = math.tanh %8 : vector<1x128xf32>
    %cst_10 = arith.constant 0.000000e+00 : f32
    %11 = vector.broadcast %cst_10 : f32 to vector<1x128xf32>
    %12 = arith.maximumf %10, %11 : vector<1x128xf32>
    %c0_11 = arith.constant 0 : index
    %c0_12 = arith.constant 0 : index
    %13 = vector.load %arg4[%c0_11, %c0_12] : memref<1x128xf32, #tpu.memory_space<vmem>>, vector<1x128xf32>
    tpu.vector_store %arg4[%c0_11, %c0_12], %12 {strides = array<i32>} : memref<1x128xf32, #tpu.memory_space<vmem>>, vector<1x128xf32>,
    return
  }
}

</mosaic_0001>

<llo_original>
// kernel: _step.1
$region0: #{_step.1}
  #allocation0 [shape = 'u32[]', space=smem, size = 0x4, offset = 0x4, fixed_abs, tag = 'smem constant byte address 0x4 - core index']
  #allocation1 [shape = 'u32[144,128]{1,0:T(1,128)}', space=vmem, size = 0x12000, scoped, tag = 'internal scratch']
  %s0 = inlined_call_operand.hbm [shape: f32[128,128], index: 0, kind: input, shape index: {}]
  %s1 = inlined_call_operand.vmem [shape: f32[1,128], index: 1, kind: input, shape index: {}]
  %s2 = inlined_call_operand.vmem [shape: f32[1,128], index: 2, kind: input, shape index: {}]
  %s3 = inlined_call_operand.vmem [shape: f32[1,128], index: 3, kind: input, shape index: {}]
  %s4 = inlined_call_operand.vmem [shape: f32[1,128], index: 4, kind: output, shape index: {0}]
  %s5 = inlined_call_operand.hbm [shape: f32[1,128], index: 5, kind: output, shape index: {1}]
  %6 = xla_tuple %s4, %s5
  %s7 = sld [smem:[#allocation0]]
  $region38: #{_step.1} parent=0
    _
  %s9 = ssub.s32 1, %s7
  %s10 = scalar_select 0, %s9, %s7
  $region1: #{_step.1} parent=0
    #allocation2 [shape = 'u8[65536]{0}', space=vmem, size = 0x10000, scoped, tag = 'input window, operand 0, single buffered']
    #allocation3 [shape = 's32[1]{0}', space=sflag, size = 0x4, scoped, tag = 'scoped memory for _step.1']
    #allocation4 [shape = 's32[1]{0}', space=sflag, size = 0x4, scoped, tag = 'scoped memory for _step.1']
    #allocation5 [shape = 'u8[512]{0}', space=vmem, size = 0x400, scoped, tag = 'output window, operand 1, single buffered']
    %11 = vsyncpa [#allocation3], 0
    %12 = vsyncpa [#allocation4], 0
    // Predicated region
    $region2: #{_step.1} parent=1 // pred_check
      _
    $region3: #{_step.1} parent=1 // pred_check_branch
      %14 = sbr.rel (0) target = $region5
    $region4: #{_step.1} parent=1 // pred_region
      %s16 = ssub.s32 2048, 2048
      %17 = vsyncadd [#allocation3], %s16
      %s18 = sshll.u32 [#allocation2], 4
      %s19 = int_to_ptr.vmem [resolvable:$true] %s18
      %24 = dma.hbm_to_vmem [thread:$0]  %s0, 2048, %s19, [#allocation3], 128, 128, 8
    $region5: #{_step.1} parent=1 // pred_fallthru
      _
    // Predicated region
    $region6: #{_step.1} parent=1 // pred_check
      _
    $region7: #{_step.1} parent=1 // pred_check_branch
      %26 = sbr.rel (0) target = $region9
    $region8: #{_step.1} parent=1 // pred_region
      _
    $region9: #{_step.1} parent=1 // pred_fallthru
      _
    // Predicated region
    $region10: #{_step.1} parent=1 // pred_check
      _
    $region11: #{_step.1} parent=1 // pred_check_branch
      %28 = sbr.rel (0) target = $region13
    $region12: #{_step.1} parent=1 // pred_region
      _
    $region13: #{_step.1} parent=1 // pred_fallthru
      _
    // Predicated region
    $region14: #{_step.1} parent=1 // pred_check
      _
    $region15: #{_step.1} parent=1 // pred_check_branch
      %30 = sbr.rel (0) target = $region17
    $region16: #{_step.1} parent=1 // pred_region
      _
    $region17: #{_step.1} parent=1 // pred_fallthru
      _
    // Predicated region
    $region18: #{_step.1} parent=1 // pred_check
      _
    $region19: #{_step.1} parent=1 // pred_check_branch
      %32 = sbr.rel (0) target = $region21
    $region20: #{_step.1} parent=1 // pred_region
      %33 = dma.done [#allocation3], 2048
    $region21: #{_step.1} parent=1 // pred_fallthru
      _
    %v34 = vld [vmem:[%s1] sm:$0x1]
    %v35 = vld [vmem:[#allocation2] sm:$0xff]
    %v36 = vld [vmem:[#allocation2 + $0x8] sm:$0xff]
    %v37 = vld [vmem:[#allocation2 + $0x10] sm:$0xff]
    %v38 = vld [vmem:[#allocation2 + $0x18] sm:$0xff]
    %v39 = vld [vmem:[#allocation2 + $0x20] sm:$0xff]
    %v40 = vld [vmem:[#allocation2 + $0x28] sm:$0xff]
    %v41 = vld [vmem:[#allocation2 + $0x30] sm:$0xff]
    %v42 = vld [vmem:[#allocation2 + $0x38] sm:$0xff]
    %v43 = vld [vmem:[#allocation2 + $0x40] sm:$0xff]
    %v44 = vld [vmem:[#allocation2 + $0x48] sm:$0xff]
    %v45 = vld [vmem:[#allocation2 + $0x50] sm:$0xff]
    %v46 = vld [vmem:[#allocation2 + $0x58] sm:$0xff]
    %v47 = vld [vmem:[#allocation2 + $0x60] sm:$0xff]
    %v48 = vld [vmem:[#allocation2 + $0x68] sm:$0xff]
    %v49 = vld [vmem:[#allocation2 + $0x70] sm:$0xff]
    %v50 = vld [vmem:[#allocation2 + $0x78] sm:$0xff]
    %v51 = vld [vmem:[%s3] sm:$0x1]
    %52 = vmatprep.subr.mxu0 0.0
    %53 = vmatpush1.msra.mxu0 %v35
    %54 = vmatprep.subr.mxu0 0.0
    %55 = vmatpush1.msra.mxu0 %v36
    %56 = vmatprep.subr.mxu0 0.0
    %57 = vmatpush1.msra.mxu0 %v37
    %58 = vmatprep.subr.mxu0 0.0
    %59 = vmatpush1.msra.mxu0 %v38
    %60 = vmatprep.subr.mxu0 0.0
    %61 = vmatpush1.msra.mxu0 %v39
    %62 = vmatprep.subr.mxu0 0.0
    %63 = vmatpush1.msra.mxu0 %v40
    %64 = vmatprep.subr.mxu0 0.0
    %65 = vmatpush1.msra.mxu0 %v41
    %66 = vmatprep.subr.mxu0 0.0
    %67 = vmatpush1.msra.mxu0 %v42
    %68 = vmatprep.subr.mxu0 0.0
    %69 = vmatpush1.msra.mxu0 %v43
    %70 = vmatprep.subr.mxu0 0.0
    %71 = vmatpush1.msra.mxu0 %v44
    %72 = vmatprep.subr.mxu0 0.0
    %73 = vmatpush1.msra.mxu0 %v45
    %74 = vmatprep.subr.mxu0 0.0
    %75 = vmatpush1.msra.mxu0 %v46
    %76 = vmatprep.subr.mxu0 0.0
    %77 = vmatpush1.msra.mxu0 %v47
    %78 = vmatprep.subr.mxu0 0.0
    %79 = vmatpush1.msra.mxu0 %v48
    %80 = vmatprep.subr.mxu0 0.0
    %81 = vmatpush1.msra.mxu0 %v49
    %82 = vmatprep.subr.mxu0 0.0
    %83 = vmatpush1.msra.mxu0 %v50
    %84 = vmatprep.subr.mxu0 0.0
    %85 = vmatpush1.msra.mxu0 0.0
    %86 = vmatprep.subr.mxu0 0.0
    %87 = vmatpush1.msra.mxu0 0.0
    %88 = vmatprep.subr.mxu0 0.0
    %89 = vmatpush1.msra.mxu0 0.0
    %90 = vmatprep.subr.mxu0 0.0
    %91 = vmatpush1.msra.mxu0 0.0
    %92 = vmatprep.subr.mxu0 0.0
    %93 = vmatpush1.msra.mxu0 0.0
    %94 = vmatprep.subr.mxu0 0.0
    %95 = vmatpush1.msra.mxu0 0.0
    %96 = vmatprep.subr.mxu0 0.0
    %97 = vmatpush1.msra.mxu0 0.0
    %98 = vmatprep.subr.mxu0 0.0
    %99 = vmatpush1.msra.mxu0 0.0
    %100 = vmatprep.subr.mxu0 0.0
    %101 = vmatpush1.msra.mxu0 0.0
    %102 = vmatprep.subr.mxu0 0.0
    %103 = vmatpush1.msra.mxu0 0.0
    %104 = vmatprep.subr.mxu0 0.0
    %105 = vmatpush1.msra.mxu0 0.0
    %106 = vmatprep.subr.mxu0 0.0
    %107 = vmatpush1.msra.mxu0 0.0
    %108 = vmatprep.subr.mxu0 0.0
    %109 = vmatpush1.msra.mxu0 0.0
    %110 = vmatprep.subr.mxu0 0.0
    %111 = vmatpush1.msra.mxu0 0.0
    %112 = vmatprep.subr.mxu0 0.0
    %113 = vmatpush1.msra.mxu0 0.0
    %114 = vmatprep.subr.mxu0 0.0
    %115 = vmatpush1.msra.mxu0 0.0
    %116 = vmatprep.mubr.f32.mxu0 0.0
    %117 = vmatmul.mubr.f32.gmra.mrb[0].mxu0 %v34
    %v118 = vpop.f32.mrb[0].mxu0
    %v119 = vadd.f32 %v51, %v118
    %v120 = vpop.f32.mrb[0].mxu0
    %121 = vdwg.mxu0
    %v122 = vld [vmem:[%s2] sm:$0x1]
    %v123 = vmul.f32 %v122, 0.95
    %v124 = vadd.f32 %v123, %v119
    %125 = vst [vmem:[#allocation5] sm:$0x1] %v124
    %v126 = vtanh.pop %v124
    %v127 = vmax.f32 %v126, 0.0
    %128 = vst [vmem:[%s4] sm:$0x1] %v127
    // Predicated region
    $region22: #{_step.1} parent=1 // pred_check
      _
    $region23: #{_step.1} parent=1 // pred_check_branch
      %130 = sbr.rel (0) target = $region25
    $region24: #{_step.1} parent=1 // pred_region
      _
    $region25: #{_step.1} parent=1 // pred_fallthru
      _
    // Predicated region
    $region26: #{_step.1} parent=1 // pred_check
      _
    $region27: #{_step.1} parent=1 // pred_check_branch
      %132 = sbr.rel (0) target = $region29
    $region28: #{_step.1} parent=1 // pred_region
      %s134 = ssub.s32 16, 16
      %135 = vsyncadd [#allocation4], %s134
      %s137 = sshll.u32 [#allocation5], 4
      %s138 = int_to_ptr.vmem [resolvable:$true] %s137
      %140 = dma.vmem_to_hbm [thread:$0]  %s138, 16, %s5, [#allocation4]
    $region29: #{_step.1} parent=1 // pred_fallthru
      _
    // Predicated region
    $region30: #{_step.1} parent=1 // pred_check
      _
    $region31: #{_step.1} parent=1 // pred_check_branch
      %142 = sbr.rel (0) target = $region33
    $region32: #{_step.1} parent=1 // pred_region
      _
    $region33: #{_step.1} parent=1 // pred_fallthru
      _
    // Predicated region
    $region34: #{_step.1} parent=1 // pred_check
      _
    $region35: #{_step.1} parent=1 // pred_check_branch
      %144 = sbr.rel (0) target = $region37
    $region36: #{_step.1} parent=1 // pred_region
      %145 = dma.done [#allocation4], 16
    $region37: #{_step.1} parent=1 // pred_fallthru
      _
    %146 = vsyncpa [#allocation3], 1
    %147 = vsyncpa [#allocation4], 1

</llo_original>
